<compile_context>
chip_gen: v7x
topology: tpu7x:2x2x1
jax: 0.10.0
libtpu: 0.0.40
codegen_flags: <defaults>
</compile_context>

<pallas_src>
import jax
import jax.numpy as jnp
from jax.experimental import pallas as pl
from jax.experimental.pallas import tpu as pltpu

EPS = 1e-5


def _style_stats_kernel(s_ref, mean_ref, std_ref):
    # s_ref: (TC, L) style sample channel tile
    s = s_ref[...].astype(jnp.float32)
    L = s.shape[-1]
    s1 = jnp.sum(s, axis=-1, keepdims=True)            # (TC, 1)
    s2 = jnp.sum(s * s, axis=-1, keepdims=True)        # (TC, 1)
    mean = s1 * (1.0 / L)
    var = (s2 - s1 * mean) / (L - 1) + EPS             # unbiased, matches torch.var
    mean_ref[...] = mean
    std_ref[...] = jnp.sqrt(var)


def _ssa_kernel(x_ref, smean_ref, sstd_ref, o_ref):
    # x_ref:     (BN, TC, L) content block
    # smean_ref: (TC, 1)     precomputed style mean
    # sstd_ref:  (TC, 1)     precomputed style std
    x = x_ref[...].astype(jnp.float32)
    L = x.shape[-1]

    # one-pass per-(n, c) content statistics (f32 accumulation)
    s1 = jnp.sum(x, axis=-1, keepdims=True)            # (BN, TC, 1)
    s2 = jnp.sum(x * x, axis=-1, keepdims=True)        # (BN, TC, 1)
    c_mean = s1 * (1.0 / L)
    c_var = (s2 - s1 * c_mean) / (L - 1) + EPS

    s_mean = smean_ref[...][None]                      # (1, TC, 1)
    s_std = sstd_ref[...][None]                        # (1, TC, 1)

    # fused affine: out = x * scale + bias
    scale = s_std * jax.lax.rsqrt(c_var)               # (BN, TC, 1), rsqrt -> EUP
    bias = s_mean - c_mean * scale
    o_ref[...] = (x * scale + bias).astype(o_ref.dtype)


def _choose_tiles(N, C, L, itemsize, budget_bytes=2 * 1024 * 1024):
    """Pick (BN, TC) so one (BN, TC, L) block stays under ~budget_bytes."""
    row = L * itemsize
    # channel tile: whole C if it fits, else largest divisor of C that is a
    # multiple of 8 (f32 sublane) and fits the budget.
    if C * row <= budget_bytes:
        tc = C
    else:
        tc = None
        for cand in range(C - (C % 8), 0, -8):
            if cand > 0 and C % cand == 0 and cand * row <= budget_bytes:
                tc = cand
                break
        if tc is None:
            tc = C  # fallback: correctness over VMEM headroom
    # batch tile: pack as many batch elements per step as fit.
    bn = 1
    for cand in range(N, 0, -1):
        if N % cand == 0 and cand * tc * row <= budget_bytes:
            bn = cand
            break
    return bn, tc


def ssa_forward(x, key):
    """x: (N, C, H, W). Returns (x_aug, idx) like SSA.forward with active=True."""
    N, C, H, W = x.shape
    L = H * W

    # idx = torch.randint(len(x), (1,)) -- deterministic via JAX PRNG.
    idx = jax.random.randint(key, (1,), 0, N, dtype=jnp.int32)

    x_flat = x.reshape(N, C, L)
    style = x_flat[idx[0]]  # (C, L) glue-level single-row gather

    itemsize = jnp.dtype(x.dtype).itemsize
    bn, tc = _choose_tiles(N, C, L, itemsize)

    # TODO(synk): if L = H*W is not a multiple of 128, pad the spatial dim in
    # the wrapper for lane-dense stores (test shape L=256 is already dense).

    # 1) style statistics -- computed exactly once.
    s_mean, s_std = pl.pallas_call(
        _style_stats_kernel,
        out_shape=(
            jax.ShapeDtypeStruct((C, 1), jnp.float32),
            jax.ShapeDtypeStruct((C, 1), jnp.float32),
        ),
        grid_spec=pltpu.PrefetchScalarGridSpec(
            num_scalar_prefetch=0,
            grid=(C // tc,),
            in_specs=[pl.BlockSpec((tc, L), lambda c: (c, 0))],
            out_specs=(
                pl.BlockSpec((tc, 1), lambda c: (c, 0)),
                pl.BlockSpec((tc, 1), lambda c: (c, 0)),
            ),
        ),
        compiler_params=pltpu.CompilerParams(dimension_semantics=("parallel",)),
    )(style)

    # 2) per-(n, c) content stats + fused scale/bias.
    out = pl.pallas_call(
        _ssa_kernel,
        out_shape=jax.ShapeDtypeStruct((N, C, L), x.dtype),
        grid_spec=pltpu.PrefetchScalarGridSpec(
            num_scalar_prefetch=0,
            grid=(N // bn, C // tc),
            in_specs=[
                pl.BlockSpec((bn, tc, L), lambda n, c: (n, c, 0)),
                pl.BlockSpec((tc, 1), lambda n, c: (c, 0)),
                pl.BlockSpec((tc, 1), lambda n, c: (c, 0)),
            ],
            out_specs=pl.BlockSpec((bn, tc, L), lambda n, c: (n, c, 0)),
        ),
        compiler_params=pltpu.CompilerParams(
            dimension_semantics=("parallel", "parallel")
        ),
    )(x_flat, s_mean, s_std)

    return out.reshape(N, C, H, W), idx


def _reference(x, idx):
    """Pure-JAX reference mirroring instance_norm_mix (unbiased var + eps)."""
    N, C, H, W = x.shape
    L = H * W
    xf = x.reshape(N, C, L).astype(jnp.float32)
    sf = xf[idx[0]]  # (C, L)

    def mean_std(v):
        m = jnp.mean(v, axis=-1, keepdims=True)
        var = jnp.sum((v - m) ** 2, axis=-1, keepdims=True) / (L - 1) + EPS
        return m, jnp.sqrt(var)

    c_mean, c_std = mean_std(xf)
    s_mean, s_std = mean_std(sf)
    out = (xf - c_mean) / c_std * s_std[None] + s_mean[None]
    return out.reshape(N, C, H, W).astype(x.dtype)


if __name__ == "__main__":
    key = jax.random.PRNGKey(0)
    k_data, k_idx = jax.random.split(key)

    N, C, H, W = 2, 4, 16, 16
    x = jax.random.normal(k_data, (N, C, H, W), dtype=jnp.float32)

    x_aug, idx = ssa_forward(x, k_idx)
    x_aug = jax.block_until_ready(x_aug)

    ref = _reference(x, idx)
    assert jnp.allclose(x_aug, ref, atol=1e-4, rtol=1e-4), "mismatch vs reference"
    print("KERNEL_OK")
</pallas_src>

<mosaic_0001>
module attributes {stable_mosaic.version = 11 : i64} {
  func.func @_style_stats_kernel(%arg0: i32, %arg1: memref<4x256xf32, #tpu.memory_space<vmem>>, %arg2: memref<4x1xf32, #tpu.memory_space<vmem>>, %arg3: memref<4x1xf32, #tpu.memory_space<vmem>>) attributes {dimension_semantics = [#tpu.dimension_semantics<parallel>], iteration_bounds = array<i64: 1>, scalar_prefetch = 0 : i64, scratch_operands = 0 : i64, tpu.core_type = #tpu.core_type<tc>, window_params = [{transform_indices = @transform_0, window_bounds = array<i64: 4, 256>}, {transform_indices = @transform_1, window_bounds = array<i64: 4, 1>}, {transform_indices = @transform_2, window_bounds = array<i64: 4, 1>}]} {
    %c0 = arith.constant 0 : index
    %c0_0 = arith.constant 0 : index
    %0 = vector.load %arg1[%c0, %c0_0] : memref<4x256xf32, #tpu.memory_space<vmem>>, vector<4x256xf32>
    %cst = arith.constant dense<0.000000e+00> : vector<4xf32>
    %1 = vector.multi_reduction <add>, %0, %cst [1] : vector<4x256xf32> to vector<4xf32>
    %2 = vector.shape_cast %1 : vector<4xf32> to vector<4x1xf32>
    %3 = arith.mulf %0, %0 : vector<4x256xf32>
    %cst_1 = arith.constant dense<0.000000e+00> : vector<4xf32>
    %4 = vector.multi_reduction <add>, %3, %cst_1 [1] : vector<4x256xf32> to vector<4xf32>
    %5 = vector.shape_cast %4 : vector<4xf32> to vector<4x1xf32>
    %cst_2 = arith.constant 3.906250e-03 : f32
    %6 = vector.broadcast %cst_2 : f32 to vector<4x1xf32>
    %7 = arith.mulf %2, %6 : vector<4x1xf32>
    %8 = arith.mulf %2, %7 : vector<4x1xf32>
    %9 = arith.subf %5, %8 : vector<4x1xf32>
    %cst_3 = arith.constant 2.550000e+02 : f32
    %10 = vector.broadcast %cst_3 : f32 to vector<4x1xf32>
    %11 = arith.divf %9, %10 : vector<4x1xf32>
    %cst_4 = arith.constant 9.99999974E-6 : f32
    %12 = vector.broadcast %cst_4 : f32 to vector<4x1xf32>
    %13 = arith.addf %11, %12 : vector<4x1xf32>
    %c0_5 = arith.constant 0 : index
    %c0_6 = arith.constant 0 : index
    %14 = vector.load %arg2[%c0_5, %c0_6] : memref<4x1xf32, #tpu.memory_space<vmem>>, vector<4x1xf32>
    tpu.vector_store %arg2[%c0_5, %c0_6], %7 {strides = array<i32>} : memref<4x1xf32, #tpu.memory_space<vmem>>, vector<4x1xf32>,
    %15 = math.sqrt %13 : vector<4x1xf32>
    %c0_7 = arith.constant 0 : index
    %c0_8 = arith.constant 0 : index
    %16 = vector.load %arg3[%c0_7, %c0_8] : memref<4x1xf32, #tpu.memory_space<vmem>>, vector<4x1xf32>
    tpu.vector_store %arg3[%c0_7, %c0_8], %15 {strides = array<i32>} : memref<4x1xf32, #tpu.memory_space<vmem>>, vector<4x1xf32>,
    return
  }
  func.func @transform_0(%arg0: i32) -> (i32, i32) {
    %c0_i32 = arith.constant 0 : i32
    %c0_i32_0 = arith.constant 0 : i32
    return %arg0, %c0_i32 : i32, i32
  }
  func.func @transform_1(%arg0: i32) -> (i32, i32) {
    %c0_i32 = arith.constant 0 : i32
    %c0_i32_0 = arith.constant 0 : i32
    return %arg0, %c0_i32 : i32, i32
  }
  func.func @transform_2(%arg0: i32) -> (i32, i32) {
    %c0_i32 = arith.constant 0 : i32
    %c0_i32_0 = arith.constant 0 : i32
    return %arg0, %c0_i32 : i32, i32
  }
}

</mosaic_0001>

<llo_original>
// kernel: tpu_custom_call.1
$region0: #{tpu_custom_call.1}
  #allocation0 [shape = 'u32[]', space=smem, size = 0x4, offset = 0x4, fixed_abs, tag = 'smem constant byte address 0x4 - core index']
  #allocation1 [shape = 'u32[144,128]{1,0:T(1,128)}', space=vmem, size = 0x12000, scoped, tag = 'internal scratch']
  %s0 = inlined_call_operand.hbm [shape: f32[4,256], index: 0, kind: input, shape index: {}]
  %s1 = inlined_call_operand.vmem [shape: f32[4,1], index: 1, kind: output, shape index: {0}]
  %s2 = inlined_call_operand.vmem [shape: f32[4,1], index: 2, kind: output, shape index: {1}]
  %3 = xla_tuple %s1, %s2
  %s4 = sld [smem:[#allocation0]]
  $region26: #{tpu_custom_call.1} parent=0
    _
  %s6 = ssub.s32 1, %s4
  %s7 = scalar_select 0, %s6, %s4
  $region1: #{tpu_custom_call.1} parent=0
    #allocation2 [shape = 'u8[4096]{0}', space=vmem, size = 0x1000, scoped, tag = 'input window, operand 0, single buffered']
    #allocation3 [shape = 's32[1]{0}', space=sflag, size = 0x4, scoped, tag = 'scoped memory for tpu_custom_call.1']
    %8 = vsyncpa [#allocation3], 0
    // Predicated region
    $region2: #{tpu_custom_call.1} parent=1 // pred_check
      _
    $region3: #{tpu_custom_call.1} parent=1 // pred_check_branch
      %10 = sbr.rel (0) target = $region5
    $region4: #{tpu_custom_call.1} parent=1 // pred_region
      %s12 = ssub.s32 128, 128
      %13 = vsyncadd [#allocation3], %s12
      %s15 = sshll.u32 [#allocation2], 4
      %s16 = int_to_ptr.vmem [resolvable:$true] %s15
      %18 = dma.hbm_to_vmem [thread:$0]  %s0, 128, %s16, [#allocation3]
    $region5: #{tpu_custom_call.1} parent=1 // pred_fallthru
      _
    // Predicated region
    $region6: #{tpu_custom_call.1} parent=1 // pred_check
      _
    $region7: #{tpu_custom_call.1} parent=1 // pred_check_branch
      %20 = sbr.rel (0) target = $region9
    $region8: #{tpu_custom_call.1} parent=1 // pred_region
      %21 = dma.done [#allocation3], 128
    $region9: #{tpu_custom_call.1} parent=1 // pred_fallthru
      _
    %v22 = vld [vmem:[#allocation2] sm:$0xff]
    %v24 = vcombine.high %v22, %v22
    %vm26 = vcmask 1043456
    %v27 = vsel %vm26, %v22, 0.0
    %v28 = vsel %vm26, %v24, 0.0
    %v29 = vadd.f32 %v27, %v28
    %30 = vadd.xlane.f32.xlu0 %v29
    %v31 = vpop.xlane.xlu0 %30
    %v32 = vmul.f32 %v22, %v22
    %v34 = vcombine.high %v32, %v32
    %v36 = vsel %vm26, %v32, 0.0
    %v37 = vsel %vm26, %v34, 0.0
    %v38 = vadd.f32 %v36, %v37
    %39 = vadd.xlane.f32.xlu0 %v38
    %v40 = vpop.xlane.xlu0 %39
    %v41 = vmul.f32 %v31, 0.00390625
    %v42 = vmul.f32 %v31, %v41
    %v43 = vsub.f32 %v40, %v42
    %v44 = vrcp.pop 255.0
    %v45 = vmul.f32 %v43, %v44
    %v46 = vadd.f32 %v45, 1e-05
    %vm47 = vcmask 3072
    %48 = vst.msk [vmem:[%s1] sm:$0xf] %vm47, %v41
    %v49 = vrsqrt.pop %v46
    %v50 = vmul.f32 %v46, %v49
    %vm51 = vcmp.eq.f32.partialorder %v46, inf
    %v52 = vsel %vm51, %v46, %v50
    %vm53 = vcmp.eq.f32.partialorder %v46, 0.0
    %v54 = vand.u32 %v46, 2147483648
    %v55 = vsel %vm53, %v54, %v52
    %56 = vst.msk [vmem:[%s2] sm:$0xf] %vm47, %v55
    // Predicated region
    $region10: #{tpu_custom_call.1} parent=1 // pred_check
      _
    $region11: #{tpu_custom_call.1} parent=1 // pred_check_branch
      %58 = sbr.rel (0) target = $region13
    $region12: #{tpu_custom_call.1} parent=1 // pred_region
      _
    $region13: #{tpu_custom_call.1} parent=1 // pred_fallthru
      _
    // Predicated region
    $region14: #{tpu_custom_call.1} parent=1 // pred_check
      _
    $region15: #{tpu_custom_call.1} parent=1 // pred_check_branch
      %60 = sbr.rel (0) target = $region17
    $region16: #{tpu_custom_call.1} parent=1 // pred_region
      _
    $region17: #{tpu_custom_call.1} parent=1 // pred_fallthru
      _
    // Predicated region
    $region18: #{tpu_custom_call.1} parent=1 // pred_check
      _
    $region19: #{tpu_custom_call.1} parent=1 // pred_check_branch
      %62 = sbr.rel (0) target = $region21
    $region20: #{tpu_custom_call.1} parent=1 // pred_region
      _
    $region21: #{tpu_custom_call.1} parent=1 // pred_fallthru
      _
    // Predicated region
    $region22: #{tpu_custom_call.1} parent=1 // pred_check
      _
    $region23: #{tpu_custom_call.1} parent=1 // pred_check_branch
      %64 = sbr.rel (0) target = $region25
    $region24: #{tpu_custom_call.1} parent=1 // pred_region
      _
    $region25: #{tpu_custom_call.1} parent=1 // pred_fallthru
      _
    %65 = vsyncpa [#allocation3], 1

</llo_original>
